<compile_context>
chip_gen: v5e
topology: v5e:2x2
jax: 0.10.0
libtpu: 0.0.40
codegen_flags: <defaults>
</compile_context>

<pallas_src>
import functools

import jax
import jax.numpy as jnp
from jax import lax
from jax.experimental import pallas as pl
from jax.experimental.pallas import tpu as pltpu

LANES = 128
SUBLANES = 8
TILE = SUBLANES * LANES            # 1024 elements = one (8,128) f32 vreg

BLOCK_ROWS = 4096                  # rows of 128 lanes per grid step (sweepable)
CHUNK_ROWS = 64                    # rows per inner fori_loop iteration
UNROLL = 4                         # inner-loop unroll factor
VMEM_LIMIT_BYTES = 32 * 1024 * 1024


def _block_sums(x_ref, t_ref, nrows, chunk, unroll):
    """Sum sigmoid(x), t, sigmoid(x)*t over the first `nrows` rows (static).

    Returns three (8, 128) f32 vreg-resident partial sums.  Only elementwise
    vreg adds (VPU) + EUP sigmoid on the hot path; no cross-lane work.
    """

    def fold(v):
        # (m, 128) -> (8, 128); tile-preserving reshape, vreg-wise adds only.
        return v.reshape(-1, SUBLANES, LANES).sum(axis=0)

    def chunk_sums(r0, nr):
        x = x_ref[pl.ds(r0, nr), :].astype(jnp.float32)
        t = t_ref[pl.ds(r0, nr), :].astype(jnp.float32)
        p = jax.nn.sigmoid(x)
        return fold(p), fold(t), fold(p * t)

    zero = jnp.zeros((SUBLANES, LANES), jnp.float32)
    sp, st, spt = zero, zero, zero

    n_chunks = nrows // chunk
    rem = nrows % chunk            # multiple of 8 (nrows and chunk are)

    if n_chunks > 0:
        def body(k, carry):
            a, b, c = carry
            r0 = pl.multiple_of(k * chunk, chunk)
            dp, dt, dpt = chunk_sums(r0, chunk)
            return a + dp, b + dt, c + dpt

        sp, st, spt = lax.fori_loop(0, n_chunks, body, (sp, st, spt),
                                    unroll=min(unroll, n_chunks))

    if rem > 0:
        dp, dt, dpt = chunk_sums(n_chunks * chunk, rem)
        sp, st, spt = sp + dp, st + dt, spt + dpt

    return sp, st, spt


def _sums_kernel(x_ref, t_ref, acc_ref, *, block_rows, last_rows,
                 blocks_per_core, total_blocks, chunk, unroll):
    """Accumulate per-lane partial sums of sigmoid(x), t and sigmoid(x)*t.

    x_ref, t_ref : (block_rows, 128) tiles in native dtype (cast to f32 here)
    acc_ref      : (1, 3, 8, 128) f32 output block, resident across the
                   reduction grid axis (per-TensorCore accumulator)
    """
    c = pl.program_id(0)           # parallel (core) axis
    i = pl.program_id(1)           # reduction axis
    block_id = c * blocks_per_core + i

    @pl.when(i == 0)
    def _init():
        acc_ref[...] = jnp.zeros_like(acc_ref)

    def accumulate(nrows):
        sp, st, spt = _block_sums(x_ref, t_ref, nrows, chunk, unroll)
        acc_ref[0, 0] += sp
        acc_ref[0, 1] += st
        acc_ref[0, 2] += spt

    if last_rows == block_rows:
        # All in-range blocks are full.  The guard only matters for the v7x
        # 2-core split when total_blocks is odd (overhang block is skipped).
        @pl.when(block_id < total_blocks)
        def _full():
            accumulate(block_rows)
    else:
        @pl.when(block_id < total_blocks - 1)
        def _full():
            accumulate(block_rows)

        @pl.when(block_id == total_blocks - 1)
        def _last():
            # Statically specialized partial last block: fewer chunks, no
            # masking, no iota.  Rows beyond last_rows are never read.
            accumulate(last_rows)


def _pallas_partial_sums(x2, t2, rows_valid):
    """Partial sums over the first `rows_valid` rows of (rows, 128) inputs.

    Returns a (num_cores, 3, 8, 128) f32 array of per-lane partial sums.
    `rows_valid` must be a positive multiple of 8 (static).
    """
    rows = x2.shape[0]
    assert rows_valid % SUBLANES == 0 and 0 < rows_valid <= rows

    block_rows = min(BLOCK_ROWS, rows_valid)          # multiple of 8
    total_blocks = pl.cdiv(rows_valid, block_rows)
    num_cores = 2 if total_blocks >= 2 else 1         # v7x dual-TC split
    blocks_per_core = pl.cdiv(total_blocks, num_cores)
    last_rows = rows_valid - (total_blocks - 1) * block_rows

    kernel = functools.partial(
        _sums_kernel,
        block_rows=block_rows,
        last_rows=last_rows,
        blocks_per_core=blocks_per_core,
        total_blocks=total_blocks,
        chunk=CHUNK_ROWS,
        unroll=UNROLL,
    )

    def in_map(c, i):
        # Clamp so the (possible) overhang iteration of the 2-core split never
        # issues an out-of-bounds DMA; its accumulation is skipped in-kernel.
        return (jnp.minimum(c * blocks_per_core + i, total_blocks - 1), 0)

    in_spec = pl.BlockSpec((block_rows, LANES), in_map)

    return pl.pallas_call(
        kernel,
        out_shape=jax.ShapeDtypeStruct((num_cores, 3, SUBLANES, LANES),
                                       jnp.float32),
        grid=(num_cores, blocks_per_core),
        in_specs=[in_spec, in_spec],
        out_specs=pl.BlockSpec((1, 3, SUBLANES, LANES),
                               lambda c, i: (c, 0, 0, 0)),
        compiler_params=pltpu.CompilerParams(
            dimension_semantics=("parallel", "arbitrary"),
            vmem_limit_bytes=VMEM_LIMIT_BYTES),
    )(x2, t2)


def _global_sums(x_flat, t_flat):
    """Returns (sum_p, sum_t, sum_pt) f32 scalars over all elements."""
    n = x_flat.shape[0]

    n_lane = (n // LANES) * LANES          # multiple of 128
    rows = n_lane // LANES
    rows_k = (rows // SUBLANES) * SUBLANES  # rows handled by the kernel
    n_kernel = rows_k * LANES

    sum_p = jnp.float32(0.0)
    sum_t = jnp.float32(0.0)
    sum_pt = jnp.float32(0.0)

    if rows_k > 0:
        if n_lane == n:
            # Free reshape, zero extra HBM traffic.
            x2 = x_flat.reshape(rows, LANES)
            t2 = t_flat.reshape(rows, LANES)
        else:
            # Only taken when numel % 128 != 0.
            # TODO(synk): a prefix slice may materialize a copy in XLA; a
            # fully copy-free path would need manual HBM DMA (memory_space=ANY).
            x2 = x_flat[:n_kernel].reshape(rows_k, LANES)
            t2 = t_flat[:n_kernel].reshape(rows_k, LANES)

        partial = _pallas_partial_sums(x2, t2, rows_k)   # (cores, 3, 8, 128)
        s = jnp.sum(partial, axis=(0, 2, 3))             # single cross-lane reduce
        sum_p, sum_t, sum_pt = s[0], s[1], s[2]

    if n_kernel < n:
        # Ragged tail (< 8*128 + 127 elements): plain JAX, negligible cost,
        # replaces both the full-array pad copy and the in-kernel mask.
        xt = x_flat[n_kernel:].astype(jnp.float32)
        tt = t_flat[n_kernel:].astype(jnp.float32)
        pt = jax.nn.sigmoid(xt)
        sum_p = sum_p + jnp.sum(pt)
        sum_t = sum_t + jnp.sum(tt)
        sum_pt = sum_pt + jnp.sum(pt * tt)

    return sum_p, sum_t, sum_pt


@functools.partial(jax.jit, static_argnames=("smooth", "alpha", "gamma"))
def dice_focal_loss(inputs, targets, smooth=1.0, alpha=0.7, gamma=4.0 / 3.0):
    # Keep native dtypes; the kernel casts to f32 on load.
    x_flat = inputs.reshape(-1)
    t = targets
    if t.dtype == jnp.bool_:
        t = t.astype(jnp.int8)     # avoid 1-bit loads; f32 cast happens in-kernel
    t_flat = t.reshape(-1)

    sum_p, sum_t, sum_pt = _global_sums(x_flat, t_flat)

    # dice_loss
    dice = (2.0 * sum_pt + smooth) / (sum_p + sum_t + smooth)
    d_loss = 1.0 - dice

    # focal_tversky_loss (assumes binary {0,1} targets, like the torch code)
    tp = sum_pt
    fp = sum_p - sum_pt            # sum((1 - t) * p)   (exact identity)
    fn = sum_t - sum_pt            # sum(t * (1 - p))   (exact identity)
    tversky = (tp + smooth) / (tp + alpha * fn + (1.0 - alpha) * fp + smooth)
    ft_loss = (1.0 - tversky) ** gamma

    return d_loss + ft_loss


def _reference_loss(inputs, targets, smooth=1.0, alpha=0.7, gamma=4.0 / 3.0):
    """Pure-JAX reference mirroring the torch implementation."""
    p = jax.nn.sigmoid(inputs.reshape(-1).astype(jnp.float32))
    t = targets.reshape(-1).astype(jnp.float32)
    inter = jnp.sum(p * t)
    dice = (2.0 * inter + smooth) / (jnp.sum(p) + jnp.sum(t) + smooth)
    tp = inter
    fp = jnp.sum((1.0 - t) * p)
    fn = jnp.sum(t * (1.0 - p))
    tversky = (tp + smooth) / (tp + alpha * fn + (1.0 - alpha) * fp + smooth)
    return (1.0 - dice) + (1.0 - tversky) ** gamma


if __name__ == "__main__":
    key = jax.random.PRNGKey(0)
    kx, kt = jax.random.split(key)

    # NCHW logits and binary targets, small shapes.
    B, C, H, W = 2, 4, 16, 16
    inputs = jax.random.normal(kx, (B, C, H, W), dtype=jnp.float32)
    targets = (jax.random.uniform(kt, (B, C, H, W)) > 0.5).astype(jnp.float32)

    loss = dice_focal_loss(inputs, targets)
    loss = jax.block_until_ready(loss)

    ref = _reference_loss(inputs, targets)
    assert jnp.allclose(loss, ref, rtol=1e-5, atol=1e-5), (loss, ref)

    print("KERNEL_OK")
</pallas_src>

<mosaic_0001>
module attributes {stable_mosaic.version = 11 : i64} {
  func.func @_sums_kernel(%arg0: i32, %arg1: i32, %arg2: memref<16x128xf32, #tpu.memory_space<vmem>>, %arg3: memref<16x128xf32, #tpu.memory_space<vmem>>, %arg4: memref<1x3x8x128xf32, #tpu.memory_space<vmem>>) attributes {dimension_semantics = [#tpu.dimension_semantics<parallel>, #tpu.dimension_semantics<arbitrary>], iteration_bounds = array<i64: 1, 1>, scalar_prefetch = 0 : i64, scratch_operands = 0 : i64, tpu.core_type = #tpu.core_type<tc>, window_params = [{transform_indices = @transform_0, window_bounds = array<i64: 16, 128>}, {transform_indices = @transform_1, window_bounds = array<i64: 16, 128>}, {transform_indices = @transform_2, window_bounds = array<i64: 1, 3, 8, 128>}]} {
    %c1_i32 = arith.constant 1 : i32
    %0 = arith.muli %arg0, %c1_i32 : i32
    %1 = arith.addi %0, %arg1 : i32
    %c0_i32 = arith.constant 0 : i32
    %2 = arith.cmpi eq, %arg1, %c0_i32 : i32
    %3 = arith.extui %2 : i1 to i32
    %c0_i32_0 = arith.constant 0 : i32
    %4 = arith.cmpi ne, %3, %c0_i32_0 : i32
    scf.if %4 {
      %cst = arith.constant 0.000000e+00 : f32
      %8 = vector.broadcast %cst : f32 to vector<1x3x8x128xf32>
      %c0 = arith.constant 0 : index
      %c0_3 = arith.constant 0 : index
      %c0_4 = arith.constant 0 : index
      %c0_5 = arith.constant 0 : index
      %9 = vector.load %arg4[%c0, %c0_3, %c0_4, %c0_5] : memref<1x3x8x128xf32, #tpu.memory_space<vmem>>, vector<1x3x8x128xf32>
      tpu.vector_store %arg4[%c0, %c0_3, %c0_4, %c0_5], %8 {strides = array<i32>} : memref<1x3x8x128xf32, #tpu.memory_space<vmem>>, vector<1x3x8x128xf32>,
    } else {
    }
    %c1_i32_1 = arith.constant 1 : i32
    %5 = arith.cmpi slt, %1, %c1_i32_1 : i32
    %6 = arith.extui %5 : i1 to i32
    %c0_i32_2 = arith.constant 0 : i32
    %7 = arith.cmpi ne, %6, %c0_i32_2 : i32
    scf.if %7 {
      %cst = arith.constant 0.000000e+00 : f32
      %8 = vector.broadcast %cst : f32 to vector<8x128xf32>
      %c0 = arith.constant 0 : index
      %c0_3 = arith.constant 0 : index
      %9 = vector.load %arg2[%c0, %c0_3] : memref<16x128xf32, #tpu.memory_space<vmem>>, vector<16x128xf32>
      %c0_4 = arith.constant 0 : index
      %c0_5 = arith.constant 0 : index
      %10 = vector.load %arg3[%c0_4, %c0_5] : memref<16x128xf32, #tpu.memory_space<vmem>>, vector<16x128xf32>
      %11 = arith.negf %9 : vector<16x128xf32>
      %12 = math.exp %11 : vector<16x128xf32>
      %cst_6 = arith.constant 1.000000e+00 : f32
      %13 = vector.broadcast %cst_6 : f32 to vector<16x128xf32>
      %14 = arith.addf %13, %12 : vector<16x128xf32>
      %15 = arith.divf %13, %14 : vector<16x128xf32>
      %16 = vector.shape_cast %15 : vector<16x128xf32> to vector<2x8x128xf32>
      %cst_7 = arith.constant dense<0.000000e+00> : vector<8x128xf32>
      %17 = vector.multi_reduction <add>, %16, %cst_7 [0] : vector<2x8x128xf32> to vector<8x128xf32>
      %18 = vector.shape_cast %10 : vector<16x128xf32> to vector<2x8x128xf32>
      %cst_8 = arith.constant dense<0.000000e+00> : vector<8x128xf32>
      %19 = vector.multi_reduction <add>, %18, %cst_8 [0] : vector<2x8x128xf32> to vector<8x128xf32>
      %20 = arith.mulf %15, %10 : vector<16x128xf32>
      %21 = vector.shape_cast %20 : vector<16x128xf32> to vector<2x8x128xf32>
      %cst_9 = arith.constant dense<0.000000e+00> : vector<8x128xf32>
      %22 = vector.multi_reduction <add>, %21, %cst_9 [0] : vector<2x8x128xf32> to vector<8x128xf32>
      %23 = arith.addf %8, %17 : vector<8x128xf32>
      %24 = arith.addf %8, %19 : vector<8x128xf32>
      %25 = arith.addf %8, %22 : vector<8x128xf32>
      %c0_10 = arith.constant 0 : index
      %c0_11 = arith.constant 0 : index
      %c0_12 = arith.constant 0 : index
      %c0_13 = arith.constant 0 : index
      %26 = vector.load %arg4[%c0_10, %c0_11, %c0_12, %c0_13] : memref<1x3x8x128xf32, #tpu.memory_space<vmem>>, vector<1x1x8x128xf32>
      %27 = vector.shape_cast %26 : vector<1x1x8x128xf32> to vector<8x128xf32>
      %28 = arith.addf %27, %23 : vector<8x128xf32>
      %c0_14 = arith.constant 0 : index
      %c0_15 = arith.constant 0 : index
      %c0_16 = arith.constant 0 : index
      %c0_17 = arith.constant 0 : index
      %29 = vector.load %arg4[%c0_14, %c0_15, %c0_16, %c0_17] : memref<1x3x8x128xf32, #tpu.memory_space<vmem>>, vector<1x1x8x128xf32>
      %30 = vector.shape_cast %29 : vector<1x1x8x128xf32> to vector<8x128xf32>
      %31 = vector.shape_cast %28 : vector<8x128xf32> to vector<1x1x8x128xf32>
      tpu.vector_store %arg4[%c0_14, %c0_15, %c0_16, %c0_17], %31 {strides = array<i32>} : memref<1x3x8x128xf32, #tpu.memory_space<vmem>>, vector<1x1x8x128xf32>,
      %c0_18 = arith.constant 0 : index
      %c1 = arith.constant 1 : index
      %c0_19 = arith.constant 0 : index
      %c0_20 = arith.constant 0 : index
      %32 = vector.load %arg4[%c0_18, %c1, %c0_19, %c0_20] : memref<1x3x8x128xf32, #tpu.memory_space<vmem>>, vector<1x1x8x128xf32>
      %33 = vector.shape_cast %32 : vector<1x1x8x128xf32> to vector<8x128xf32>
      %34 = arith.addf %33, %24 : vector<8x128xf32>
      %c0_21 = arith.constant 0 : index
      %c1_22 = arith.constant 1 : index
      %c0_23 = arith.constant 0 : index
      %c0_24 = arith.constant 0 : index
      %35 = vector.load %arg4[%c0_21, %c1_22, %c0_23, %c0_24] : memref<1x3x8x128xf32, #tpu.memory_space<vmem>>, vector<1x1x8x128xf32>
      %36 = vector.shape_cast %35 : vector<1x1x8x128xf32> to vector<8x128xf32>
      %37 = vector.shape_cast %34 : vector<8x128xf32> to vector<1x1x8x128xf32>
      tpu.vector_store %arg4[%c0_21, %c1_22, %c0_23, %c0_24], %37 {strides = array<i32>} : memref<1x3x8x128xf32, #tpu.memory_space<vmem>>, vector<1x1x8x128xf32>,
      %c0_25 = arith.constant 0 : index
      %c2 = arith.constant 2 : index
      %c0_26 = arith.constant 0 : index
      %c0_27 = arith.constant 0 : index
      %38 = vector.load %arg4[%c0_25, %c2, %c0_26, %c0_27] : memref<1x3x8x128xf32, #tpu.memory_space<vmem>>, vector<1x1x8x128xf32>
      %39 = vector.shape_cast %38 : vector<1x1x8x128xf32> to vector<8x128xf32>
      %40 = arith.addf %39, %25 : vector<8x128xf32>
      %c0_28 = arith.constant 0 : index
      %c2_29 = arith.constant 2 : index
      %c0_30 = arith.constant 0 : index
      %c0_31 = arith.constant 0 : index
      %41 = vector.load %arg4[%c0_28, %c2_29, %c0_30, %c0_31] : memref<1x3x8x128xf32, #tpu.memory_space<vmem>>, vector<1x1x8x128xf32>
      %42 = vector.shape_cast %41 : vector<1x1x8x128xf32> to vector<8x128xf32>
      %43 = vector.shape_cast %40 : vector<8x128xf32> to vector<1x1x8x128xf32>
      tpu.vector_store %arg4[%c0_28, %c2_29, %c0_30, %c0_31], %43 {strides = array<i32>} : memref<1x3x8x128xf32, #tpu.memory_space<vmem>>, vector<1x1x8x128xf32>,
    } else {
    }
    return
  }
  func.func @transform_0(%arg0: i32, %arg1: i32) -> (i32, i32) {
    %c1_i32 = arith.constant 1 : i32
    %0 = arith.muli %arg0, %c1_i32 : i32
    %1 = arith.addi %0, %arg1 : i32
    %c0_i32 = arith.constant 0 : i32
    %2 = arith.minsi %1, %c0_i32 : i32
    %c0_i32_0 = arith.constant 0 : i32
    %c0_i32_1 = arith.constant 0 : i32
    return %2, %c0_i32_0 : i32, i32
  }
  func.func @transform_1(%arg0: i32, %arg1: i32) -> (i32, i32) {
    %c1_i32 = arith.constant 1 : i32
    %0 = arith.muli %arg0, %c1_i32 : i32
    %1 = arith.addi %0, %arg1 : i32
    %c0_i32 = arith.constant 0 : i32
    %2 = arith.minsi %1, %c0_i32 : i32
    %c0_i32_0 = arith.constant 0 : i32
    %c0_i32_1 = arith.constant 0 : i32
    return %2, %c0_i32_0 : i32, i32
  }
  func.func @transform_2(%arg0: i32, %arg1: i32) -> (i32, i32, i32, i32) {
    %c0_i32 = arith.constant 0 : i32
    %c0_i32_0 = arith.constant 0 : i32
    %c0_i32_1 = arith.constant 0 : i32
    %c0_i32_2 = arith.constant 0 : i32
    return %arg0, %c0_i32, %c0_i32_0, %c0_i32_1 : i32, i32, i32, i32
  }
}

</mosaic_0001>

<llo_original>
// kernel: dice_focal_loss.1
$region0: #{dice_focal_loss.1}
  #allocation0 [shape = 'u32[]', space=smem, size = 0x4, offset = 0x4, fixed_abs, tag = 'smem constant byte address 0x4 - core index']
  #allocation1 [shape = 'u32[72,128]{1,0:T(1,128)}', space=vmem, size = 0x9000, scoped, tag = 'internal scratch']
  %s0 = inlined_call_operand.vmem [shape: f32[16,128], index: 0, kind: input, shape index: {}]
  %s1 = inlined_call_operand.vmem [shape: f32[16,128], index: 1, kind: input, shape index: {}]
  %s2 = inlined_call_operand.vmem [shape: f32[1,3,8,128], index: 2, kind: output, shape index: {}]
  %s3 = sld [smem:[#allocation0]]
  $region26: #{dice_focal_loss.1} parent=0
    _
  %s5 = ssub.s32 1, %s3
  %s6 = scalar_select 0, %s5, %s3
  // Predicated region
  $region2: #{dice_focal_loss.1} parent=0 // pred_check
    _
  $region3: #{dice_focal_loss.1} parent=0 // pred_check_branch
    %8 = sbr.rel (0) target = $region5
  $region4: #{dice_focal_loss.1} parent=0 // pred_region
    %s9 = sadd.s32 0, 0
    %p10 = scmp.lt.s32.totalorder %s9, 0
    %s11 = scalar_select %p10, %s9, 0
    %s12 = smul.u32 2, %s11
    %p13 = scmp.lt.s32.totalorder %s12, 1
    %s14 = scalar_select %p13, %s12, 1
    %s15 = smul.addr %s14, 8
    %s16 = scalar_lea.vmem %s0, %s15
    %s17 = sadd.s32 0, 0
    %p18 = scmp.lt.s32.totalorder %s17, 0
    %s19 = scalar_select %p18, %s17, 0
    %s20 = smul.u32 2, %s19
  $region5: #{dice_focal_loss.1} parent=0 // pred_fallthru
    _
  // Predicated region
  $region6: #{dice_focal_loss.1} parent=0 // pred_check
    _
  $region7: #{dice_focal_loss.1} parent=0 // pred_check_branch
    %22 = sbr.rel (0) target = $region9
  $region8: #{dice_focal_loss.1} parent=0 // pred_region
    %s23 = sadd.s32 0, 0
    %p24 = scmp.lt.s32.totalorder %s23, 0
    %s25 = scalar_select %p24, %s23, 0
    %s26 = smul.u32 2, %s25
    %p27 = scmp.lt.s32.totalorder %s26, 1
    %s28 = scalar_select %p27, %s26, 1
    %s29 = smul.addr %s28, 8
    %s30 = scalar_lea.vmem %s1, %s29
    %s31 = sadd.s32 0, 0
    %p32 = scmp.lt.s32.totalorder %s31, 0
    %s33 = scalar_select %p32, %s31, 0
    %s34 = smul.u32 2, %s33
  $region9: #{dice_focal_loss.1} parent=0 // pred_fallthru
    _
  %s35 = sadd.s32 0, 0
  %p36 = scmp.lt.s32.totalorder %s35, 0
  %s37 = scalar_select %p36, %s35, 0
  %s38 = smul.u32 2, %s37
  %p39 = scmp.lt.s32.totalorder %s38, 1
  %s40 = scalar_select %p39, %s38, 1
  %s41 = smul.addr %s40, 8
  %s42 = scalar_lea.vmem %s0, %s41
  %s43 = sadd.s32 0, 0
  %p44 = scmp.lt.s32.totalorder %s43, 0
  %s45 = scalar_select %p44, %s43, 0
  %s46 = smul.u32 2, %s45
  %p47 = scmp.lt.s32.totalorder %s46, 1
  %s48 = scalar_select %p47, %s46, 1
  %s49 = smul.addr %s48, 8
  %s50 = scalar_lea.vmem %s1, %s49
  %s51 = sadd.s32 0, 0
  %p52 = scmp.lt.s32.totalorder %s51, 0
  %s53 = scalar_select %p52, %s51, 0
  %s54 = smul.u32 2, %s53
  %p55 = scmp.lt.s32.totalorder %s54, 1
  %s56 = scalar_select %p55, %s54, 1
  %s57 = smul.addr %s56, 8
  %s58 = scalar_lea.vmem %s0, %s57
  %s59 = sadd.s32 0, 0
  %p60 = scmp.lt.s32.totalorder %s59, 0
  %s61 = scalar_select %p60, %s59, 0
  %s62 = smul.u32 2, %s61
  %s63 = sadd.s32 0, 0
  %p64 = scmp.lt.s32.totalorder %s63, 0
  %s65 = scalar_select %p64, %s63, 0
  %s66 = smul.u32 2, %s65
  %p67 = scmp.lt.s32.totalorder %s66, 1
  %s68 = scalar_select %p67, %s66, 1
  %s69 = smul.addr %s68, 8
  %s70 = scalar_lea.vmem %s1, %s69
  %s71 = sadd.s32 0, 0
  %p72 = scmp.lt.s32.totalorder %s71, 0
  %s73 = scalar_select %p72, %s71, 0
  %s74 = smul.u32 2, %s73
  %s75 = sadd.s32 0, 0
  %p76 = scmp.eq.s32.totalorder 0, 0
  // Predicated region
  $region10: #{dice_focal_loss.1} parent=0 // pred_check
    %p77 = pneg %p76
  $region11: #{dice_focal_loss.1} parent=0 // pred_check_branch
    %79 = sbr.rel (%p77) target = $region13
  $region12: #{dice_focal_loss.1} parent=0 // pred_region
    %80 = vst [vmem:[%s2] sm:$0xff] 0.0
    %81 = vst [vmem:[%s2 + $0x8] sm:$0xff] 0.0
    %82 = vst [vmem:[%s2 + $0x10] sm:$0xff] 0.0
  $region13: #{dice_focal_loss.1} parent=0 // pred_fallthru
    _
  %p83 = scmp.lt.s32.totalorder %s75, 1
  // Predicated region
  $region14: #{dice_focal_loss.1} parent=0 // pred_check
    %p84 = pneg %p83
  $region15: #{dice_focal_loss.1} parent=0 // pred_check_branch
    %86 = sbr.rel (%p84) target = $region17
  $region16: #{dice_focal_loss.1} parent=0 // pred_region
    %v87 = vld [vmem:[%s58] sm:$0xff]
    %v88 = vld [vmem:[%s58 + $0x8] sm:$0xff]
    %v89 = vld [vmem:[%s70] sm:$0xff]
    %v90 = vld [vmem:[%s70 + $0x8] sm:$0xff]
    %v91 = vxor.u32 %v87, 2147483648
    %v92 = vxor.u32 %v88, 2147483648
    %v93 = vmul.f32 %v91, 1.442695
    %v94 = vpow.pop %v93
    %v95 = vmul.f32 %v92, 1.442695
    %v96 = vpow.pop %v95
    %v97 = vadd.f32 %v94, 1.0
    %v98 = vadd.f32 %v96, 1.0
    %v99 = vrcp.pop %v97
    %v100 = vmul.f32 %v97, %v99
    %v101 = vsub.f32 1.0, %v100
    %v102 = vmul.f32 %v99, %v101
    %v103 = vadd.f32 %v99, %v102
    %vm104 = vweird.f32 %v97
    %vm105 = vweird.f32 %v99
    %vm106 = vmor %vm104, %vm105
    %v107 = vsel %vm106, %v99, %v103
    %v108 = vand.u32 2147483647, %v97
    %vm109 = vcmp.eq.f32.partialorder %v108, 8.507059e+37
    %v110 = vand.u32 %v97, 2147483648
    %v111 = vor.u32 1.1754944e-38, %v110
    %v112 = vsel %vm109, %v111, %v107
    %v113 = vmul.f32 1.0, %v112
    %v114 = vrcp.pop %v98
    %v115 = vmul.f32 %v98, %v114
    %v116 = vsub.f32 1.0, %v115
    %v117 = vmul.f32 %v114, %v116
    %v118 = vadd.f32 %v114, %v117
    %vm119 = vweird.f32 %v98
    %vm120 = vweird.f32 %v114
    %vm121 = vmor %vm119, %vm120
    %v122 = vsel %vm121, %v114, %v118
    %v123 = vand.u32 2147483647, %v98
    %vm124 = vcmp.eq.f32.partialorder %v123, 8.507059e+37
    %v125 = vand.u32 %v98, 2147483648
    %v126 = vor.u32 1.1754944e-38, %v125
    %v127 = vsel %vm124, %v126, %v122
    %v128 = vmul.f32 1.0, %v127
    %v129 = vadd.f32 %v113, %v128
    %v130 = vadd.f32 %v89, %v90
    %v131 = vmul.f32 %v113, %v89
    %v132 = vmul.f32 %v128, %v90
    %v133 = vadd.f32 %v131, %v132
    %v134 = vadd.f32 %v129, 0.0
    %v135 = vadd.f32 %v130, 0.0
    %v136 = vadd.f32 %v133, 0.0
    %v137 = vld [vmem:[%s2] sm:$0xff]
    %v138 = vadd.f32 %v137, %v134
    %139 = vst [vmem:[%s2] sm:$0xff] %v138
    %s140 = scalar_lea.vmem %s2, 8
    %v141 = vld [vmem:[%s140] sm:$0xff]
    %v142 = vadd.f32 %v141, %v135
    %143 = vst [vmem:[%s140] sm:$0xff] %v142
    %s144 = scalar_lea.vmem %s2, 16
    %v145 = vld [vmem:[%s144] sm:$0xff]
    %v146 = vadd.f32 %v145, %v136
    %147 = vst [vmem:[%s144] sm:$0xff] %v146
  $region17: #{dice_focal_loss.1} parent=0 // pred_fallthru
    _
  // Predicated region
  $region18: #{dice_focal_loss.1} parent=0 // pred_check
    _
  $region19: #{dice_focal_loss.1} parent=0 // pred_check_branch
    %149 = sbr.rel (0) target = $region21
  $region20: #{dice_focal_loss.1} parent=0 // pred_region
    _
  $region21: #{dice_focal_loss.1} parent=0 // pred_fallthru
    _
  // Predicated region
  $region22: #{dice_focal_loss.1} parent=0 // pred_check
    _
  $region23: #{dice_focal_loss.1} parent=0 // pred_check_branch
    %151 = sbr.rel (0) target = $region25
  $region24: #{dice_focal_loss.1} parent=0 // pred_region
    _
  $region25: #{dice_focal_loss.1} parent=0 // pred_fallthru
    _

</llo_original>
